<compile_context>
chip_gen: v5e
topology: v5e:2x2
jax: 0.10.0
libtpu: 0.0.40
codegen_flags: <defaults>
</compile_context>

<pallas_src>
import jax
import jax.numpy as jnp
from jax.experimental import pallas as pl
from jax.experimental.pallas import tpu as pltpu

P = 8          # rows packed per lane-dense "super-row"
D_IN = 32      # input / reconstruction features
D_ENC = 12     # latent features


def sae_kernel(x_ref, w12_ref, b12_ref, w34_ref, b34_ref, enc_ref, rec_ref):
    x = x_ref[...]                                                   # (tbp, 256)

    # Fused encoder (block-diagonal): ReLU(x_packed @ W12_bd + b12_bd)
    enc = jnp.dot(x, w12_ref[...], preferred_element_type=jnp.float32)
    enc = jnp.maximum(enc + b12_ref[...], 0.0)                       # (tbp, 96)
    enc_ref[...] = enc.astype(enc_ref.dtype)

    # Fused decoder (block-diagonal): ReLU(enc_packed @ W34_bd + b34_bd)
    rec = jnp.dot(enc, w34_ref[...], preferred_element_type=jnp.float32)
    rec_ref[...] = jnp.maximum(rec + b34_ref[...], 0.0).astype(rec_ref.dtype)


def prepare_params(params):
    """One-time (load-time) fusion + block-diagonal packing of the 4 Linears.

    encoder: Linear(32,64) -> Linear(64,12) -> ReLU   ==> ReLU(x @ W12 + b12)
    decoder: Linear(12,64) -> Linear(64,32) -> ReLU   ==> ReLU(e @ W34 + b34)
    then kron(I_P, .) so P rows of x processed per packed row.
    """
    w1, b1, w2, b2, w3, b3, w4, b4 = params
    w12 = jnp.dot(w1, w2, preferred_element_type=jnp.float32)        # (32, 12)
    b12 = jnp.dot(b1, w2, preferred_element_type=jnp.float32) + b2   # (1, 12)
    w34 = jnp.dot(w3, w4, preferred_element_type=jnp.float32)        # (12, 32)
    b34 = jnp.dot(b3, w4, preferred_element_type=jnp.float32) + b4   # (1, 32)

    eye = jnp.eye(P, dtype=jnp.float32)
    w12_bd = jnp.kron(eye, w12)                                      # (256, 96)
    w34_bd = jnp.kron(eye, w34)                                      # (96, 256)
    b12_bd = jnp.tile(b12, (1, P))                                   # (1, 96)
    b34_bd = jnp.tile(b34, (1, P))                                   # (1, 256)
    return (w12_bd, b12_bd, w34_bd, b34_bd)


def my_sae_forward(x, fused_params, *, tb=16384):
    """x: (B, 32) float32. Returns (encode (B, 12), rec_x (B, 32)).

    tb = batch tile in *original* rows (default 16384 -> 2048 packed rows,
    ~10 MiB of double-buffered VMEM: safe on v5e/v6e/v7x scoped defaults).
    """
    B, D = x.shape
    assert D == D_IN
    w12_bd, b12_bd, w34_bd, b34_bd = fused_params

    # --- Pack rows: (B, 32) -> (B/8, 256). Same row-major bytes, so the
    # reshape is free. Only pad when B isn't a multiple of 8 (<= 7 rows).
    Bp = pl.cdiv(B, P) * P
    x_in = x if Bp == B else jnp.pad(x, ((0, Bp - B), (0, 0)))
    rows = Bp // P
    xp = x_in.reshape(rows, P * D_IN)

    # --- Packed-row tile: multiple of 8 sublanes, and keep >= 2 grid steps
    # when there is enough work so both v7x TensorCores get fed.
    tbp = max(8, (min(tb // P, rows) // 8) * 8)
    if rows >= 16:
        tbp = min(tbp, pl.cdiv(pl.cdiv(rows, 2), 8) * 8)
    grid = (pl.cdiv(rows, tbp),)   # partial last block handled by Pallas

    in_specs = [
        pl.BlockSpec((tbp, P * D_IN), lambda i: (i, 0)),   # packed x
        pl.BlockSpec(w12_bd.shape, lambda i: (0, 0)),      # replicated weights
        pl.BlockSpec(b12_bd.shape, lambda i: (0, 0)),
        pl.BlockSpec(w34_bd.shape, lambda i: (0, 0)),
        pl.BlockSpec(b34_bd.shape, lambda i: (0, 0)),
    ]
    out_specs = (
        pl.BlockSpec((tbp, P * D_ENC), lambda i: (i, 0)),  # packed encode
        pl.BlockSpec((tbp, P * D_IN), lambda i: (i, 0)),   # packed rec_x
    )
    out_shape = (
        jax.ShapeDtypeStruct((rows, P * D_ENC), jnp.float32),
        jax.ShapeDtypeStruct((rows, P * D_IN), jnp.float32),
    )

    enc_p, rec_p = pl.pallas_call(
        sae_kernel,
        grid=grid,
        in_specs=in_specs,
        out_specs=out_specs,
        out_shape=out_shape,
        compiler_params=pltpu.CompilerParams(
            dimension_semantics=("parallel",)),
    )(xp, w12_bd, b12_bd, w34_bd, b34_bd)

    # Unpack: byte-layout-identical reshapes (free), then drop the <=7 pad rows.
    enc = enc_p.reshape(Bp, D_ENC)
    rec = rec_p.reshape(Bp, D_IN)
    if Bp != B:
        enc = enc[:B]
        rec = rec[:B]
    return enc, rec


def init_params(key):
    """Deterministic init. Weights stored (in, out); biases (1, out)."""
    ks = jax.random.split(key, 8)

    def lin(kw, kb, fan_in, fan_out):
        bound = 1.0 / jnp.sqrt(fan_in)
        w = jax.random.uniform(kw, (fan_in, fan_out), jnp.float32, -bound, bound)
        b = jax.random.uniform(kb, (1, fan_out), jnp.float32, -bound, bound)
        return w, b

    w1, b1 = lin(ks[0], ks[1], 32, 64)
    w2, b2 = lin(ks[2], ks[3], 64, 12)
    w3, b3 = lin(ks[4], ks[5], 12, 64)
    w4, b4 = lin(ks[6], ks[7], 64, 32)
    return (w1, b1, w2, b2, w3, b3, w4, b4)


def reference_forward(x, params):
    """Layer-by-layer reference matching the PyTorch module."""
    w1, b1, w2, b2, w3, b3, w4, b4 = params
    enc = jnp.maximum((x @ w1 + b1) @ w2 + b2, 0.0)
    rec = jnp.maximum((enc @ w3 + b3) @ w4 + b4, 0.0)
    return enc, rec


if __name__ == "__main__":
    key = jax.random.PRNGKey(0)
    k_x, k_x2, k_x3, k_p = jax.random.split(key, 4)
    params = init_params(k_p)
    fused = prepare_params(params)          # hoisted out of the hot path

    fwd = jax.jit(my_sae_forward, static_argnames=("tb",))

    def check(x, tb=16384, atol=1e-4, rtol=1e-4):
        enc, rec = fwd(x, fused, tb=tb)
        jax.block_until_ready((enc, rec))
        enc_ref, rec_ref = reference_forward(x, params)
        assert enc.shape == (x.shape[0], D_ENC) and rec.shape == (x.shape[0], D_IN)
        assert jnp.allclose(enc, enc_ref, atol=atol, rtol=rtol)
        assert jnp.allclose(rec, rec_ref, atol=atol, rtol=rtol)

    # Small, packing-aligned batch (single grid step).
    check(jax.random.normal(k_x, (64, 32), dtype=jnp.float32))

    # Ragged batch (B not a multiple of the packing factor 8).
    check(jax.random.normal(k_x2, (20, 32), dtype=jnp.float32))

    # Larger batch: multi-step grid + 2-TC tile clamp path.
    check(jax.random.normal(k_x3, (4096, 32), dtype=jnp.float32))

    print("KERNEL_OK")
</pallas_src>

<mosaic_0001>
module attributes {stable_mosaic.version = 11 : i64} {
  func.func @sae_kernel(%arg0: i32, %arg1: memref<8x256xf32, #tpu.memory_space<vmem>>, %arg2: memref<256x96xf32, #tpu.memory_space<vmem>>, %arg3: memref<1x96xf32, #tpu.memory_space<vmem>>, %arg4: memref<96x256xf32, #tpu.memory_space<vmem>>, %arg5: memref<1x256xf32, #tpu.memory_space<vmem>>, %arg6: memref<8x96xf32, #tpu.memory_space<vmem>>, %arg7: memref<8x256xf32, #tpu.memory_space<vmem>>) attributes {dimension_semantics = [#tpu.dimension_semantics<parallel>], iteration_bounds = array<i64: 1>, scalar_prefetch = 0 : i64, scratch_operands = 0 : i64, tpu.core_type = #tpu.core_type<tc>, window_params = [{transform_indices = @transform_0, window_bounds = array<i64: 8, 256>}, {pipeline_mode = #tpu.pipeline_mode<synchronous>, transform_indices = @transform_1, window_bounds = array<i64: 256, 96>}, {pipeline_mode = #tpu.pipeline_mode<synchronous>, transform_indices = @transform_2, window_bounds = array<i64: 1, 96>}, {pipeline_mode = #tpu.pipeline_mode<synchronous>, transform_indices = @transform_3, window_bounds = array<i64: 96, 256>}, {pipeline_mode = #tpu.pipeline_mode<synchronous>, transform_indices = @transform_4, window_bounds = array<i64: 1, 256>}, {transform_indices = @transform_5, window_bounds = array<i64: 8, 96>}, {transform_indices = @transform_6, window_bounds = array<i64: 8, 256>}]} {
    %c0 = arith.constant 0 : index
    %c0_0 = arith.constant 0 : index
    %0 = vector.load %arg1[%c0, %c0_0] : memref<8x256xf32, #tpu.memory_space<vmem>>, vector<8x256xf32>
    %c0_1 = arith.constant 0 : index
    %c0_2 = arith.constant 0 : index
    %1 = vector.load %arg2[%c0_1, %c0_2] : memref<256x96xf32, #tpu.memory_space<vmem>>, vector<256x96xf32>
    %cst = arith.constant dense<0.000000e+00> : vector<8x96xf32>
    %2 = tpu.matmul %0, %1, %cst {dimension_numbers = #tpu.dot_dimension_numbers<[1], [0], [0], [1], [0, 0, 1, 1], [], []>} : vector<8x256xf32>, vector<256x96xf32>, vector<8x96xf32> -> vector<8x96xf32>
    %c0_3 = arith.constant 0 : index
    %c0_4 = arith.constant 0 : index
    %3 = vector.load %arg3[%c0_3, %c0_4] : memref<1x96xf32, #tpu.memory_space<vmem>>, vector<1x96xf32>
    %4 = vector.broadcast %3 : vector<1x96xf32> to vector<8x96xf32>
    %5 = arith.addf %2, %4 : vector<8x96xf32>
    %cst_5 = arith.constant 0.000000e+00 : f32
    %6 = vector.broadcast %cst_5 : f32 to vector<8x96xf32>
    %7 = arith.maximumf %5, %6 : vector<8x96xf32>
    %c0_6 = arith.constant 0 : index
    %c0_7 = arith.constant 0 : index
    %8 = vector.load %arg6[%c0_6, %c0_7] : memref<8x96xf32, #tpu.memory_space<vmem>>, vector<8x96xf32>
    tpu.vector_store %arg6[%c0_6, %c0_7], %7 {strides = array<i32>} : memref<8x96xf32, #tpu.memory_space<vmem>>, vector<8x96xf32>,
    %c0_8 = arith.constant 0 : index
    %c0_9 = arith.constant 0 : index
    %9 = vector.load %arg4[%c0_8, %c0_9] : memref<96x256xf32, #tpu.memory_space<vmem>>, vector<96x256xf32>
    %cst_10 = arith.constant dense<0.000000e+00> : vector<8x256xf32>
    %10 = tpu.matmul %7, %9, %cst_10 {dimension_numbers = #tpu.dot_dimension_numbers<[1], [0], [0], [1], [0, 0, 1, 1], [], []>} : vector<8x96xf32>, vector<96x256xf32>, vector<8x256xf32> -> vector<8x256xf32>
    %c0_11 = arith.constant 0 : index
    %c0_12 = arith.constant 0 : index
    %11 = vector.load %arg5[%c0_11, %c0_12] : memref<1x256xf32, #tpu.memory_space<vmem>>, vector<1x256xf32>
    %12 = vector.broadcast %11 : vector<1x256xf32> to vector<8x256xf32>
    %13 = arith.addf %10, %12 : vector<8x256xf32>
    %cst_13 = arith.constant 0.000000e+00 : f32
    %14 = vector.broadcast %cst_13 : f32 to vector<8x256xf32>
    %15 = arith.maximumf %13, %14 : vector<8x256xf32>
    %c0_14 = arith.constant 0 : index
    %c0_15 = arith.constant 0 : index
    %16 = vector.load %arg7[%c0_14, %c0_15] : memref<8x256xf32, #tpu.memory_space<vmem>>, vector<8x256xf32>
    tpu.vector_store %arg7[%c0_14, %c0_15], %15 {strides = array<i32>} : memref<8x256xf32, #tpu.memory_space<vmem>>, vector<8x256xf32>,
    return
  }
  func.func @transform_0(%arg0: i32) -> (i32, i32) {
    %c0_i32 = arith.constant 0 : i32
    %c0_i32_0 = arith.constant 0 : i32
    return %arg0, %c0_i32 : i32, i32
  }
  func.func @transform_1(%arg0: i32) -> (i32, i32) {
    %c0_i32 = arith.constant 0 : i32
    %c0_i32_0 = arith.constant 0 : i32
    %c0_i32_1 = arith.constant 0 : i32
    return %c0_i32, %c0_i32_0 : i32, i32
  }
  func.func @transform_2(%arg0: i32) -> (i32, i32) {
    %c0_i32 = arith.constant 0 : i32
    %c0_i32_0 = arith.constant 0 : i32
    %c0_i32_1 = arith.constant 0 : i32
    return %c0_i32, %c0_i32_0 : i32, i32
  }
  func.func @transform_3(%arg0: i32) -> (i32, i32) {
    %c0_i32 = arith.constant 0 : i32
    %c0_i32_0 = arith.constant 0 : i32
    %c0_i32_1 = arith.constant 0 : i32
    return %c0_i32, %c0_i32_0 : i32, i32
  }
  func.func @transform_4(%arg0: i32) -> (i32, i32) {
    %c0_i32 = arith.constant 0 : i32
    %c0_i32_0 = arith.constant 0 : i32
    %c0_i32_1 = arith.constant 0 : i32
    return %c0_i32, %c0_i32_0 : i32, i32
  }
  func.func @transform_5(%arg0: i32) -> (i32, i32) {
    %c0_i32 = arith.constant 0 : i32
    %c0_i32_0 = arith.constant 0 : i32
    return %arg0, %c0_i32 : i32, i32
  }
  func.func @transform_6(%arg0: i32) -> (i32, i32) {
    %c0_i32 = arith.constant 0 : i32
    %c0_i32_0 = arith.constant 0 : i32
    return %arg0, %c0_i32 : i32, i32
  }
}

</mosaic_0001>

<llo_original>
// kernel: my_sae_forward.1
$region0: #{my_sae_forward.1}
  #allocation0 [shape = 'u32[]', space=smem, size = 0x4, offset = 0x4, fixed_abs, tag = 'smem constant byte address 0x4 - core index']
  #allocation1 [shape = 'u32[72,128]{1,0:T(1,128)}', space=vmem, size = 0x9000, scoped, tag = 'internal scratch']
  %s0 = inlined_call_operand.vmem [shape: f32[8,256], index: 0, kind: input, shape index: {}]
  %s1 = inlined_call_operand.vmem [shape: f32[256,96], index: 1, kind: input, shape index: {}]
  %s2 = inlined_call_operand.vmem [shape: f32[1,96], index: 2, kind: input, shape index: {}]
  %s3 = inlined_call_operand.vmem [shape: f32[96,256], index: 3, kind: input, shape index: {}]
  %s4 = inlined_call_operand.vmem [shape: f32[1,256], index: 4, kind: input, shape index: {}]
  %s5 = inlined_call_operand.vmem [shape: f32[8,96], index: 5, kind: output, shape index: {0}]
  %s6 = inlined_call_operand.vmem [shape: f32[8,256], index: 6, kind: output, shape index: {1}]
  %7 = xla_tuple %s5, %s6
  %s8 = sld [smem:[#allocation0]]
  $region38: #{my_sae_forward.1} parent=0
    _
  %s10 = ssub.s32 1, %s8
  %s11 = scalar_select 0, %s10, %s8
  // Predicated region
  $region2: #{my_sae_forward.1} parent=0 // pred_check
    _
  $region3: #{my_sae_forward.1} parent=0 // pred_check_branch
    %13 = sbr.rel (0) target = $region5
  $region4: #{my_sae_forward.1} parent=0 // pred_region
    _
  $region5: #{my_sae_forward.1} parent=0 // pred_fallthru
    _
  // Predicated region
  $region6: #{my_sae_forward.1} parent=0 // pred_check
    _
  $region7: #{my_sae_forward.1} parent=0 // pred_check_branch
    %15 = sbr.rel (0) target = $region9
  $region8: #{my_sae_forward.1} parent=0 // pred_region
    _
  $region9: #{my_sae_forward.1} parent=0 // pred_fallthru
    _
  // Predicated region
  $region10: #{my_sae_forward.1} parent=0 // pred_check
    _
  $region11: #{my_sae_forward.1} parent=0 // pred_check_branch
    %17 = sbr.rel (0) target = $region13
  $region12: #{my_sae_forward.1} parent=0 // pred_region
    _
  $region13: #{my_sae_forward.1} parent=0 // pred_fallthru
    _
  // Predicated region
  $region14: #{my_sae_forward.1} parent=0 // pred_check
    _
  $region15: #{my_sae_forward.1} parent=0 // pred_check_branch
    %19 = sbr.rel (0) target = $region17
  $region16: #{my_sae_forward.1} parent=0 // pred_region
    _
  $region17: #{my_sae_forward.1} parent=0 // pred_fallthru
    _
  // Predicated region
  $region18: #{my_sae_forward.1} parent=0 // pred_check
    _
  $region19: #{my_sae_forward.1} parent=0 // pred_check_branch
    %21 = sbr.rel (0) target = $region21
  $region20: #{my_sae_forward.1} parent=0 // pred_region
    _
  $region21: #{my_sae_forward.1} parent=0 // pred_fallthru
    _
  %v22 = vld [vmem:[%s0] sm:$0xff]
  %v23 = vld [vmem:[%s0 + $0x8] sm:$0xff]
  %v24 = vld [vmem:[%s1] sm:$0xff]
  %v25 = vld [vmem:[%s1 + $0x8] sm:$0xff]
  %v26 = vld [vmem:[%s1 + $0x10] sm:$0xff]
  %v27 = vld [vmem:[%s1 + $0x18] sm:$0xff]
  %v28 = vld [vmem:[%s1 + $0x20] sm:$0xff]
  %v29 = vld [vmem:[%s1 + $0x28] sm:$0xff]
  %v30 = vld [vmem:[%s1 + $0x30] sm:$0xff]
  %v31 = vld [vmem:[%s1 + $0x38] sm:$0xff]
  %v32 = vld [vmem:[%s1 + $0x40] sm:$0xff]
  %v33 = vld [vmem:[%s1 + $0x48] sm:$0xff]
  %v34 = vld [vmem:[%s1 + $0x50] sm:$0xff]
  %v35 = vld [vmem:[%s1 + $0x58] sm:$0xff]
  %v36 = vld [vmem:[%s1 + $0x60] sm:$0xff]
  %v37 = vld [vmem:[%s1 + $0x68] sm:$0xff]
  %v38 = vld [vmem:[%s1 + $0x70] sm:$0xff]
  %v39 = vld [vmem:[%s1 + $0x78] sm:$0xff]
  %v40 = vld [vmem:[%s1 + $0x80] sm:$0xff]
  %v41 = vld [vmem:[%s1 + $0x88] sm:$0xff]
  %v42 = vld [vmem:[%s1 + $0x90] sm:$0xff]
  %v43 = vld [vmem:[%s1 + $0x98] sm:$0xff]
  %v44 = vld [vmem:[%s1 + $0xa0] sm:$0xff]
  %v45 = vld [vmem:[%s1 + $0xa8] sm:$0xff]
  %v46 = vld [vmem:[%s1 + $0xb0] sm:$0xff]
  %v47 = vld [vmem:[%s1 + $0xb8] sm:$0xff]
  %v48 = vld [vmem:[%s1 + $0xc0] sm:$0xff]
  %v49 = vld [vmem:[%s1 + $0xc8] sm:$0xff]
  %v50 = vld [vmem:[%s1 + $0xd0] sm:$0xff]
  %v51 = vld [vmem:[%s1 + $0xd8] sm:$0xff]
  %v52 = vld [vmem:[%s1 + $0xe0] sm:$0xff]
  %v53 = vld [vmem:[%s1 + $0xe8] sm:$0xff]
  %v54 = vld [vmem:[%s1 + $0xf0] sm:$0xff]
  %v55 = vld [vmem:[%s1 + $0xf8] sm:$0xff]
  %v56 = vld [vmem:[%s2] sm:$0x1]
  %v58 = vperm.slane %v56, 0
  %60 = vmatpush.msra.mxu0 %v39
  %61 = vmatpush.msra.mxu0 %v38
  %62 = vmatpush.msra.mxu0 %v37
  %63 = vmatpush.msra.mxu0 %v36
  %64 = vmatpush.msra.mxu0 %v35
  %65 = vmatpush.msra.mxu0 %v34
  %66 = vmatpush.msra.mxu0 %v33
  %67 = vmatpush.msra.mxu0 %v32
  %68 = vmatpush.msra.mxu0 %v31
  %69 = vmatpush.msra.mxu0 %v30
  %70 = vmatpush.msra.mxu0 %v29
  %71 = vmatpush.msra.mxu0 %v28
  %72 = vmatpush.msra.mxu0 %v27
  %73 = vmatpush.msra.mxu0 %v26
  %74 = vmatpush.msra.mxu0 %v25
  %75 = vmatpush.msra.mxu0 %v24
  %76 = vmatmul.f32.gmra.mxu0 %v22
  %v77 = vpop.f32.mrf.mxu0
  %v78 = vadd.f32 %v58, %v77
  %79 = vdwg.mxu0
  %80 = vmatpush.msra.mxu0 %v55
  %81 = vmatpush.msra.mxu0 %v54
  %82 = vmatpush.msra.mxu0 %v53
  %83 = vmatpush.msra.mxu0 %v52
  %84 = vmatpush.msra.mxu0 %v51
  %85 = vmatpush.msra.mxu0 %v50
  %86 = vmatpush.msra.mxu0 %v49
  %87 = vmatpush.msra.mxu0 %v48
  %88 = vmatpush.msra.mxu0 %v47
  %89 = vmatpush.msra.mxu0 %v46
  %90 = vmatpush.msra.mxu0 %v45
  %91 = vmatpush.msra.mxu0 %v44
  %92 = vmatpush.msra.mxu0 %v43
  %93 = vmatpush.msra.mxu0 %v42
  %94 = vmatpush.msra.mxu0 %v41
  %95 = vmatpush.msra.mxu0 %v40
  %96 = vmatmul.f32.gmra.mxu0 %v23
  %v97 = vpop.f32.mrf.mxu0
  %v98 = vadd.f32 %v78, %v97
  %99 = vdwg.mxu0
  %v100 = vmax.f32 %v98, 0.0
  %vm101 = vcmask 785408
  %102 = vst.msk [vmem:[%s5] sm:$0xff] %vm101, %v100
  %v103 = vld [vmem:[%s3] sm:$0xff]
  %v104 = vld [vmem:[%s3 + $0x8] sm:$0xff]
  %v105 = vld [vmem:[%s3 + $0x10] sm:$0xff]
  %v106 = vld [vmem:[%s3 + $0x18] sm:$0xff]
  %v107 = vld [vmem:[%s3 + $0x20] sm:$0xff]
  %v108 = vld [vmem:[%s3 + $0x28] sm:$0xff]
  %v109 = vld [vmem:[%s3 + $0x30] sm:$0xff]
  %v110 = vld [vmem:[%s3 + $0x38] sm:$0xff]
  %v111 = vld [vmem:[%s3 + $0x40] sm:$0xff]
  %v112 = vld [vmem:[%s3 + $0x48] sm:$0xff]
  %v113 = vld [vmem:[%s3 + $0x50] sm:$0xff]
  %v114 = vld [vmem:[%s3 + $0x58] sm:$0xff]
  %v115 = vld [vmem:[%s3 + $0x60] sm:$0xff]
  %v116 = vld [vmem:[%s3 + $0x68] sm:$0xff]
  %v117 = vld [vmem:[%s3 + $0x70] sm:$0xff]
  %v118 = vld [vmem:[%s3 + $0x78] sm:$0xff]
  %v119 = vld [vmem:[%s3 + $0x80] sm:$0xff]
  %v120 = vld [vmem:[%s3 + $0x88] sm:$0xff]
  %v121 = vld [vmem:[%s3 + $0x90] sm:$0xff]
  %v122 = vld [vmem:[%s3 + $0x98] sm:$0xff]
  %v123 = vld [vmem:[%s3 + $0xa0] sm:$0xff]
  %v124 = vld [vmem:[%s3 + $0xa8] sm:$0xff]
  %v125 = vld [vmem:[%s3 + $0xb0] sm:$0xff]
  %v126 = vld [vmem:[%s3 + $0xb8] sm:$0xff]
  %v127 = vld [vmem:[%s4] sm:$0x3]
  %v129 = vperm.slane %v127, 0
  %v130 = vperm.slane %v127, 1
  %v134 = vsel %vm101, %v100, 0
  %136 = vmatpush.msra.mxu0 0.0
  %137 = vmatpush.msra.mxu0 0.0
  %138 = vmatpush.msra.mxu0 0.0
  %139 = vmatpush.msra.mxu0 0.0
  %140 = vmatpush.msra.mxu0 %v125
  %141 = vmatpush.msra.mxu0 %v123
  %142 = vmatpush.msra.mxu0 %v121
  %143 = vmatpush.msra.mxu0 %v119
  %144 = vmatpush.msra.mxu0 %v117
  %145 = vmatpush.msra.mxu0 %v115
  %146 = vmatpush.msra.mxu0 %v113
  %147 = vmatpush.msra.mxu0 %v111
  %148 = vmatpush.msra.mxu0 %v109
  %149 = vmatpush.msra.mxu0 %v107
  %150 = vmatpush.msra.mxu0 %v105
  %151 = vmatpush.msra.mxu0 %v103
  %152 = vmatmul.f32.gmra.mxu0 %v134
  %v153 = vpop.f32.mrf.mxu0
  %v154 = vadd.f32 %v129, %v153
  %155 = vdwg.mxu0
  %156 = vmatpush.msra.mxu0 0.0
  %157 = vmatpush.msra.mxu0 0.0
  %158 = vmatpush.msra.mxu0 0.0
  %159 = vmatpush.msra.mxu0 0.0
  %160 = vmatpush.msra.mxu0 %v126
  %161 = vmatpush.msra.mxu0 %v124
  %162 = vmatpush.msra.mxu0 %v122
  %163 = vmatpush.msra.mxu0 %v120
  %164 = vmatpush.msra.mxu0 %v118
  %165 = vmatpush.msra.mxu0 %v116
  %166 = vmatpush.msra.mxu0 %v114
  %167 = vmatpush.msra.mxu0 %v112
  %168 = vmatpush.msra.mxu0 %v110
  %169 = vmatpush.msra.mxu0 %v108
  %170 = vmatpush.msra.mxu0 %v106
  %171 = vmatpush.msra.mxu0 %v104
  %172 = vmatmul.f32.gmra.mxu0 %v134
  %v173 = vpop.f32.mrf.mxu0
  %v174 = vadd.f32 %v130, %v173
  %175 = vdwg.mxu0
  %v176 = vmax.f32 %v154, 0.0
  %v177 = vmax.f32 %v174, 0.0
  %178 = vst [vmem:[%s6] sm:$0xff] %v176
  %179 = vst [vmem:[%s6 + $0x8] sm:$0xff] %v177
  // Predicated region
  $region22: #{my_sae_forward.1} parent=0 // pred_check
    _
  $region23: #{my_sae_forward.1} parent=0 // pred_check_branch
    %181 = sbr.rel (0) target = $region25
  $region24: #{my_sae_forward.1} parent=0 // pred_region
    _
  $region25: #{my_sae_forward.1} parent=0 // pred_fallthru
    _
  // Predicated region
  $region26: #{my_sae_forward.1} parent=0 // pred_check
    _
  $region27: #{my_sae_forward.1} parent=0 // pred_check_branch
    %183 = sbr.rel (0) target = $region29
  $region28: #{my_sae_forward.1} parent=0 // pred_region
    _
  $region29: #{my_sae_forward.1} parent=0 // pred_fallthru
    _
  // Predicated region
  $region30: #{my_sae_forward.1} parent=0 // pred_check
    _
  $region31: #{my_sae_forward.1} parent=0 // pred_check_branch
    %185 = sbr.rel (0) target = $region33
  $region32: #{my_sae_forward.1} parent=0 // pred_region
    _
  $region33: #{my_sae_forward.1} parent=0 // pred_fallthru
    _
  // Predicated region
  $region34: #{my_sae_forward.1} parent=0 // pred_check
    _
  $region35: #{my_sae_forward.1} parent=0 // pred_check_branch
    %187 = sbr.rel (0) target = $region37
  $region36: #{my_sae_forward.1} parent=0 // pred_region
    _
  $region37: #{my_sae_forward.1} parent=0 // pred_fallthru
    _

</llo_original>
